<compile_context>
chip_gen: v7x
topology: tpu7x:2x2x1
jax: 0.10.0
libtpu: 0.0.40
codegen_flags: <defaults>
</compile_context>

<pallas_src>
import jax
import jax.numpy as jnp
from jax.experimental import pallas as pl
from jax.experimental.pallas import tpu as pltpu


def _round_up(x, m):
    return (x + m - 1) // m * m


def _sigmoid(z):
    # exp rides the EUP slot; approx reciprocal also lowers to EUP instead of
    # VALU Newton iterations -> keeps the vector-ALU slot slack (review item).
    return pl.reciprocal(1.0 + jnp.exp(-z), approx=True)


def _mlp_kernel(x_ref, w1_ref, b1_ref, w2_ref, b2_ref, w3_ref, b3_ref, o_ref):
    # x streamed from HBM once as f32; cast to bf16 (MXU-native) inside the kernel so
    # the wrapper never materializes a padded/cast copy in HBM.
    x = x_ref[...].astype(jnp.bfloat16)
    # fc1 + sigmoid (f32 accumulation / activation math)
    h1 = jnp.dot(x, w1_ref[...], preferred_element_type=jnp.float32)
    h1 = _sigmoid(h1 + b1_ref[...])
    # fc2 + sigmoid
    h2 = jnp.dot(h1.astype(jnp.bfloat16), w2_ref[...], preferred_element_type=jnp.float32)
    h2 = _sigmoid(h2 + b2_ref[...])
    # fc3 logits (lane-dense 128-wide padded output; no activation, matches PyTorch)
    h3 = jnp.dot(h2.astype(jnp.bfloat16), w3_ref[...], preferred_element_type=jnp.float32)
    o_ref[...] = (h3 + b3_ref[...]).astype(o_ref.dtype)


def _select_tb(requested, batch, input_dim, h1, h2, n_pad):
    """Pick a batch tile that stays inside a conservative per-core VMEM budget."""
    try:
        vmem_cap = pltpu.get_tpu_info().vmem_capacity_bytes
    except Exception:
        vmem_cap = 64 << 20
    # Per-core working budget: v7x runs both TensorCores concurrently (batch axis is
    # "parallel"), each against 64 MiB; stay well under it and under what we will
    # request via vmem_limit_bytes on v5e/v6e.
    budget = int(min(vmem_cap, 64 << 20) * 0.45)
    weights_bytes = ((input_dim * h1 + h1 * h2 + h2 * n_pad) * 2     # bf16 weights
                     + (h1 + h2 + n_pad) * 4)                        # f32 biases
    per_row = (2 * input_dim * 4       # double-buffered f32 x tile
               + 2 * n_pad * 4         # double-buffered f32 out tile
               + (h1 + h2) * 6)        # f32 activations + bf16 MXU casts
    tb_cap = max(8, (budget - 2 * weights_bytes) // per_row)
    tb = min(requested, tb_cap)
    if batch <= tb:
        # Single block: block_shape equal to the full array dim is always legal.
        return batch, weights_bytes, per_row, vmem_cap
    tb = max(8, (tb // 8) * 8)         # sublane (8) constraint for full blocks
    return tb, weights_bytes, per_row, vmem_cap


def linear_classifier_forward(x, params, *, block_batch=1024, return_padded=False):
    """Fused MLP forward. x: [batch, input_dim] f32 -> [batch, n_classes] f32 logits.

    With return_padded=True the lane-padded [batch, round_up(n_classes, 128)] slab is
    returned so the consumer can fold the class slice into its own op.
    """
    w1, b1, w2, b2, w3, b3 = params
    batch, input_dim = x.shape
    h1_dim = w1.shape[1]          # 128
    h2_dim = w2.shape[1]          # 256
    n_classes = w3.shape[1]
    n_pad = _round_up(n_classes, 128)   # lane-dense output (unmasked vst stores)

    tb, weights_bytes, per_row, vmem_cap = _select_tb(
        block_batch, batch, input_dim, h1_dim, h2_dim, n_pad)

    # Weights/biases: tiny, one-time bf16 cast + class-lane padding of fc3 only.
    w1b = w1.astype(jnp.bfloat16)
    w2b = w2.astype(jnp.bfloat16)
    w3p = jnp.zeros((h2_dim, n_pad), jnp.bfloat16).at[:, :n_classes].set(
        w3.astype(jnp.bfloat16))
    b1f = b1.reshape(1, h1_dim).astype(jnp.float32)
    b2f = b2.reshape(1, h2_dim).astype(jnp.float32)
    b3p = jnp.zeros((1, n_pad), jnp.float32).at[:, :n_classes].set(
        b3.reshape(1, n_classes).astype(jnp.float32))

    grid = (pl.cdiv(batch, tb),)        # ragged last block handled by Pallas masking
    const = lambda i: (0, 0)

    # Honest scheduling hint: real dtypes/widths, no padded-copy bytes.
    flops = 2 * batch * (input_dim * h1_dim + h1_dim * h2_dim + h2_dim * n_pad)
    transcendentals = batch * (h1_dim + h2_dim)
    bytes_accessed = (batch * input_dim * 4          # x read (f32, unpadded)
                      + weights_bytes                # resident weights / biases
                      + batch * n_pad * 4)           # logits write

    est_vmem = 2 * weights_bytes + tb * per_row + (2 << 20)   # + compiler scratch headroom
    vmem_limit = int(min(vmem_cap, max(2 * est_vmem, 32 << 20)))

    out = pl.pallas_call(
        _mlp_kernel,
        out_shape=jax.ShapeDtypeStruct((batch, n_pad), jnp.float32),
        grid=grid,
        in_specs=[
            # x: tiled over batch, full (unpadded) feature width, streamed as f32.
            pl.BlockSpec((tb, input_dim), lambda i: (i, 0)),
            # Weights / biases: constant index maps -> VMEM-resident across the grid.
            pl.BlockSpec((input_dim, h1_dim), const),
            pl.BlockSpec((1, h1_dim), const),
            pl.BlockSpec((h1_dim, h2_dim), const),
            pl.BlockSpec((1, h2_dim), const),
            pl.BlockSpec((h2_dim, n_pad), const),
            pl.BlockSpec((1, n_pad), const),
        ],
        out_specs=pl.BlockSpec((tb, n_pad), lambda i: (i, 0)),
        compiler_params=pltpu.CompilerParams(
            dimension_semantics=("parallel",),
            vmem_limit_bytes=vmem_limit,
        ),
        cost_estimate=pl.CostEstimate(
            flops=flops,
            transcendentals=transcendentals,
            bytes_accessed=bytes_accessed,
        ),
    )(x, w1b, b1f, w2b, b2f, w3p, b3p)

    if return_padded:
        return out                      # consumer folds the class slice into its op
    return out[:, :n_classes]


def init_params(key, input_dim, n_classes):
    """Deterministic init mirroring nn.Linear shapes (weights stored transposed)."""
    ks = jax.random.split(key, 6)

    def linear(kw, kb, fan_in, fan_out):
        bound = 1.0 / jnp.sqrt(fan_in)
        w = jax.random.uniform(kw, (fan_in, fan_out), jnp.float32, -bound, bound)
        b = jax.random.uniform(kb, (1, fan_out), jnp.float32, -bound, bound)
        return w, b

    w1, b1 = linear(ks[0], ks[1], input_dim, 128)
    w2, b2 = linear(ks[2], ks[3], 128, 256)
    w3, b3 = linear(ks[4], ks[5], 256, n_classes)
    return (w1, b1, w2, b2, w3, b3)


# TODO(synk): optimizer (Adam), CrossEntropyLoss and learn() are training-time host logic,
# not part of the forward pass; only forward() is implemented as a Pallas kernel.

if __name__ == "__main__":
    key = jax.random.PRNGKey(0)
    k_x, k_p = jax.random.split(key)

    batch = 8
    input_dim = 64          # input_dims = (64,)
    n_classes = 10

    x = jax.random.normal(k_x, (batch, input_dim), jnp.float32)
    params = init_params(k_p, input_dim, n_classes)

    out = linear_classifier_forward(x, params)
    jax.block_until_ready(out)
    assert out.shape == (batch, n_classes)
    assert out.dtype == jnp.float32

    # Reference with matching mixed precision (bf16 MXU operands, f32 accumulation).
    w1, b1, w2, b2, w3, b3 = params
    h = jax.nn.sigmoid(jnp.dot(x.astype(jnp.bfloat16), w1.astype(jnp.bfloat16),
                               preferred_element_type=jnp.float32) + b1)
    h = jax.nn.sigmoid(jnp.dot(h.astype(jnp.bfloat16), w2.astype(jnp.bfloat16),
                               preferred_element_type=jnp.float32) + b2)
    ref = jnp.dot(h.astype(jnp.bfloat16), w3.astype(jnp.bfloat16),
                  preferred_element_type=jnp.float32) + b3
    assert jnp.allclose(out, ref, atol=2e-2, rtol=2e-2)

    # Loose check against the full-f32 PyTorch-equivalent forward (bf16 + approx-recip tol).
    rf = jax.nn.sigmoid(x @ w1 + b1)
    rf = jax.nn.sigmoid(rf @ w2 + b2)
    rf = rf @ w3 + b3
    assert jnp.allclose(out, rf, atol=6e-2, rtol=6e-2)

    print("KERNEL_OK")
</pallas_src>

<mosaic_0001>
module attributes {stable_mosaic.version = 11 : i64} {
  func.func @_mlp_kernel(%arg0: i32, %arg1: memref<8x64xf32, #tpu.memory_space<vmem>>, %arg2: memref<64x128xbf16, #tpu.memory_space<vmem>>, %arg3: memref<1x128xf32, #tpu.memory_space<vmem>>, %arg4: memref<128x256xbf16, #tpu.memory_space<vmem>>, %arg5: memref<1x256xf32, #tpu.memory_space<vmem>>, %arg6: memref<256x128xbf16, #tpu.memory_space<vmem>>, %arg7: memref<1x128xf32, #tpu.memory_space<vmem>>, %arg8: memref<8x128xf32, #tpu.memory_space<vmem>>) attributes {dimension_semantics = [#tpu.dimension_semantics<parallel>], iteration_bounds = array<i64: 1>, scalar_prefetch = 0 : i64, scratch_operands = 0 : i64, tpu.core_type = #tpu.core_type<tc>, window_params = [{transform_indices = @transform_0, window_bounds = array<i64: 8, 64>}, {pipeline_mode = #tpu.pipeline_mode<synchronous>, transform_indices = @transform_1, window_bounds = array<i64: 64, 128>}, {pipeline_mode = #tpu.pipeline_mode<synchronous>, transform_indices = @transform_2, window_bounds = array<i64: 1, 128>}, {pipeline_mode = #tpu.pipeline_mode<synchronous>, transform_indices = @transform_3, window_bounds = array<i64: 128, 256>}, {pipeline_mode = #tpu.pipeline_mode<synchronous>, transform_indices = @transform_4, window_bounds = array<i64: 1, 256>}, {pipeline_mode = #tpu.pipeline_mode<synchronous>, transform_indices = @transform_5, window_bounds = array<i64: 256, 128>}, {pipeline_mode = #tpu.pipeline_mode<synchronous>, transform_indices = @transform_6, window_bounds = array<i64: 1, 128>}, {transform_indices = @transform_7, window_bounds = array<i64: 8, 128>}]} {
    %c0 = arith.constant 0 : index
    %c0_0 = arith.constant 0 : index
    %0 = vector.load %arg1[%c0, %c0_0] : memref<8x64xf32, #tpu.memory_space<vmem>>, vector<8x64xf32>
    %1 = arith.truncf %0 : vector<8x64xf32> to vector<8x64xbf16>
    %c0_1 = arith.constant 0 : index
    %c0_2 = arith.constant 0 : index
    %2 = vector.load %arg2[%c0_1, %c0_2] : memref<64x128xbf16, #tpu.memory_space<vmem>>, vector<64x128xbf16>
    %cst = arith.constant dense<0.000000e+00> : vector<8x128xf32>
    %3 = tpu.matmul %1, %2, %cst {dimension_numbers = #tpu.dot_dimension_numbers<[1], [0], [0], [1], [0, 0, 1, 1], [], []>} : vector<8x64xbf16>, vector<64x128xbf16>, vector<8x128xf32> -> vector<8x128xf32>
    %c0_3 = arith.constant 0 : index
    %c0_4 = arith.constant 0 : index
    %4 = vector.load %arg3[%c0_3, %c0_4] : memref<1x128xf32, #tpu.memory_space<vmem>>, vector<1x128xf32>
    %5 = vector.broadcast %4 : vector<1x128xf32> to vector<8x128xf32>
    %6 = arith.addf %3, %5 : vector<8x128xf32>
    %cst_5 = arith.constant 0.000000e+00 : f32
    %7 = vector.broadcast %cst_5 : f32 to vector<8x128xf32>
    %8 = arith.subf %7, %6 : vector<8x128xf32>
    %9 = math.exp %8 : vector<8x128xf32>
    %cst_6 = arith.constant 1.000000e+00 : f32
    %10 = vector.broadcast %cst_6 : f32 to vector<8x128xf32>
    %11 = arith.addf %10, %9 : vector<8x128xf32>
    %12 = tpu.reciprocal %11 {approx = true} : vector<8x128xf32> -> vector<8x128xf32>
    %13 = arith.truncf %12 : vector<8x128xf32> to vector<8x128xbf16>
    %c0_7 = arith.constant 0 : index
    %c0_8 = arith.constant 0 : index
    %14 = vector.load %arg4[%c0_7, %c0_8] : memref<128x256xbf16, #tpu.memory_space<vmem>>, vector<128x256xbf16>
    %cst_9 = arith.constant dense<0.000000e+00> : vector<8x256xf32>
    %15 = tpu.matmul %13, %14, %cst_9 {dimension_numbers = #tpu.dot_dimension_numbers<[1], [0], [0], [1], [0, 0, 1, 1], [], []>} : vector<8x128xbf16>, vector<128x256xbf16>, vector<8x256xf32> -> vector<8x256xf32>
    %c0_10 = arith.constant 0 : index
    %c0_11 = arith.constant 0 : index
    %16 = vector.load %arg5[%c0_10, %c0_11] : memref<1x256xf32, #tpu.memory_space<vmem>>, vector<1x256xf32>
    %17 = vector.broadcast %16 : vector<1x256xf32> to vector<8x256xf32>
    %18 = arith.addf %15, %17 : vector<8x256xf32>
    %cst_12 = arith.constant 0.000000e+00 : f32
    %19 = vector.broadcast %cst_12 : f32 to vector<8x256xf32>
    %20 = arith.subf %19, %18 : vector<8x256xf32>
    %21 = math.exp %20 : vector<8x256xf32>
    %cst_13 = arith.constant 1.000000e+00 : f32
    %22 = vector.broadcast %cst_13 : f32 to vector<8x256xf32>
    %23 = arith.addf %22, %21 : vector<8x256xf32>
    %24 = tpu.reciprocal %23 {approx = true} : vector<8x256xf32> -> vector<8x256xf32>
    %25 = arith.truncf %24 : vector<8x256xf32> to vector<8x256xbf16>
    %c0_14 = arith.constant 0 : index
    %c0_15 = arith.constant 0 : index
    %26 = vector.load %arg6[%c0_14, %c0_15] : memref<256x128xbf16, #tpu.memory_space<vmem>>, vector<256x128xbf16>
    %cst_16 = arith.constant dense<0.000000e+00> : vector<8x128xf32>
    %27 = tpu.matmul %25, %26, %cst_16 {dimension_numbers = #tpu.dot_dimension_numbers<[1], [0], [0], [1], [0, 0, 1, 1], [], []>} : vector<8x256xbf16>, vector<256x128xbf16>, vector<8x128xf32> -> vector<8x128xf32>
    %c0_17 = arith.constant 0 : index
    %c0_18 = arith.constant 0 : index
    %28 = vector.load %arg7[%c0_17, %c0_18] : memref<1x128xf32, #tpu.memory_space<vmem>>, vector<1x128xf32>
    %29 = vector.broadcast %28 : vector<1x128xf32> to vector<8x128xf32>
    %30 = arith.addf %27, %29 : vector<8x128xf32>
    %c0_19 = arith.constant 0 : index
    %c0_20 = arith.constant 0 : index
    %31 = vector.load %arg8[%c0_19, %c0_20] : memref<8x128xf32, #tpu.memory_space<vmem>>, vector<8x128xf32>
    tpu.vector_store %arg8[%c0_19, %c0_20], %30 {strides = array<i32>} : memref<8x128xf32, #tpu.memory_space<vmem>>, vector<8x128xf32>,
    return
  }
  func.func @transform_0(%arg0: i32) -> (i32, i32) {
    %c0_i32 = arith.constant 0 : i32
    %c0_i32_0 = arith.constant 0 : i32
    return %arg0, %c0_i32 : i32, i32
  }
  func.func @transform_1(%arg0: i32) -> (i32, i32) {
    %c0_i32 = arith.constant 0 : i32
    %c0_i32_0 = arith.constant 0 : i32
    %c0_i32_1 = arith.constant 0 : i32
    return %c0_i32, %c0_i32_0 : i32, i32
  }
  func.func @transform_2(%arg0: i32) -> (i32, i32) {
    %c0_i32 = arith.constant 0 : i32
    %c0_i32_0 = arith.constant 0 : i32
    %c0_i32_1 = arith.constant 0 : i32
    return %c0_i32, %c0_i32_0 : i32, i32
  }
  func.func @transform_3(%arg0: i32) -> (i32, i32) {
    %c0_i32 = arith.constant 0 : i32
    %c0_i32_0 = arith.constant 0 : i32
    %c0_i32_1 = arith.constant 0 : i32
    return %c0_i32, %c0_i32_0 : i32, i32
  }
  func.func @transform_4(%arg0: i32) -> (i32, i32) {
    %c0_i32 = arith.constant 0 : i32
    %c0_i32_0 = arith.constant 0 : i32
    %c0_i32_1 = arith.constant 0 : i32
    return %c0_i32, %c0_i32_0 : i32, i32
  }
  func.func @transform_5(%arg0: i32) -> (i32, i32) {
    %c0_i32 = arith.constant 0 : i32
    %c0_i32_0 = arith.constant 0 : i32
    %c0_i32_1 = arith.constant 0 : i32
    return %c0_i32, %c0_i32_0 : i32, i32
  }
  func.func @transform_6(%arg0: i32) -> (i32, i32) {
    %c0_i32 = arith.constant 0 : i32
    %c0_i32_0 = arith.constant 0 : i32
    %c0_i32_1 = arith.constant 0 : i32
    return %c0_i32, %c0_i32_0 : i32, i32
  }
  func.func @transform_7(%arg0: i32) -> (i32, i32) {
    %c0_i32 = arith.constant 0 : i32
    %c0_i32_0 = arith.constant 0 : i32
    return %arg0, %c0_i32 : i32, i32
  }
}

</mosaic_0001>

<llo_original>
// kernel: tpu_custom_call.1
$region0: #{tpu_custom_call.1}
  #allocation0 [shape = 'u32[]', space=smem, size = 0x4, offset = 0x4, fixed_abs, tag = 'smem constant byte address 0x4 - core index']
  #allocation1 [shape = 'u32[144,128]{1,0:T(1,128)}', space=vmem, size = 0x12000, scoped, tag = 'internal scratch']
  %s0 = inlined_call_operand.hbm [shape: f32[8,64], index: 0, kind: input, shape index: {}]
  %s1 = inlined_call_operand.hbm [shape: bf16[64,128], index: 1, kind: input, shape index: {}]
  %s2 = inlined_call_operand.vmem [shape: f32[1,128], index: 2, kind: input, shape index: {}]
  %s3 = inlined_call_operand.hbm [shape: bf16[128,256], index: 3, kind: input, shape index: {}]
  %s4 = inlined_call_operand.vmem [shape: f32[1,256], index: 4, kind: input, shape index: {}]
  %s5 = inlined_call_operand.hbm [shape: bf16[256,128], index: 5, kind: input, shape index: {}]
  %s6 = inlined_call_operand.vmem [shape: f32[1,128], index: 6, kind: input, shape index: {}]
  %s7 = inlined_call_operand.hbm [shape: f32[8,128], index: 7, kind: output, shape index: {}]
  %s8 = sld [smem:[#allocation0]]
  $region54: #{tpu_custom_call.1} parent=0
    _
  %s10 = ssub.s32 1, %s8
  %s11 = scalar_select 0, %s10, %s8
  $region1: #{tpu_custom_call.1} parent=0
    #allocation2 [shape = 'u8[4096]{0}', space=vmem, size = 0x1000, scoped, tag = 'input window, operand 0, single buffered']
    #allocation3 [shape = 's32[1]{0}', space=sflag, size = 0x4, scoped, tag = 'scoped memory for tpu_custom_call.1']
    #allocation4 [shape = 's32[1]{0}', space=sflag, size = 0x4, scoped, tag = 'scoped memory for tpu_custom_call.1']
    #allocation5 [shape = 'u8[16384]{0}', space=vmem, size = 0x4000, scoped, tag = 'input window, operand 1, single buffered']
    #allocation6 [shape = 's32[1]{0}', space=sflag, size = 0x4, scoped, tag = 'scoped memory for tpu_custom_call.1']
    #allocation7 [shape = 'u8[65536]{0}', space=vmem, size = 0x10000, scoped, tag = 'input window, operand 3, single buffered']
    #allocation8 [shape = 'u8[65536]{0}', space=vmem, size = 0x10000, scoped, tag = 'input window, operand 5, single buffered']
    #allocation9 [shape = 's32[1]{0}', space=sflag, size = 0x4, scoped, tag = 'scoped memory for tpu_custom_call.1']
    #allocation10 [shape = 'u8[4096]{0}', space=vmem, size = 0x1000, scoped, tag = 'output window, operand 0, single buffered']
    %12 = vsyncpa [#allocation3], 0
    %13 = vsyncpa [#allocation6], 0
    %14 = vsyncpa [#allocation9], 0
    %15 = vsyncpa [#allocation4], 0
    // Predicated region
    $region2: #{tpu_custom_call.1} parent=1 // pred_check
      _
    $region3: #{tpu_custom_call.1} parent=1 // pred_check_branch
      %17 = sbr.rel (0) target = $region5
    $region4: #{tpu_custom_call.1} parent=1 // pred_region
      %s19 = ssub.s32 128, 128
      %20 = vsyncadd [#allocation3], %s19
      %s22 = sshll.u32 [#allocation2], 4
      %s23 = int_to_ptr.vmem [resolvable:$true] %s22
      %25 = dma.hbm_to_vmem [thread:$0]  %s0, 128, %s23, [#allocation3]
    $region5: #{tpu_custom_call.1} parent=1 // pred_fallthru
      _
    // Predicated region
    $region6: #{tpu_custom_call.1} parent=1 // pred_check
      _
    $region7: #{tpu_custom_call.1} parent=1 // pred_check_branch
      %27 = sbr.rel (0) target = $region9
    $region8: #{tpu_custom_call.1} parent=1 // pred_region
      %s29 = ssub.s32 512, 512
      %30 = vsyncadd [#allocation6], %s29
      %s31 = sshll.u32 [#allocation5], 4
      %s32 = int_to_ptr.vmem [resolvable:$true] %s31
      %37 = dma.hbm_to_vmem [thread:$0]  %s1, 512, %s32, [#allocation6], 64, 64, 4
    $region9: #{tpu_custom_call.1} parent=1 // pred_fallthru
      _
    // Predicated region
    $region10: #{tpu_custom_call.1} parent=1 // pred_check
      _
    $region11: #{tpu_custom_call.1} parent=1 // pred_check_branch
      %39 = sbr.rel (0) target = $region13
    $region12: #{tpu_custom_call.1} parent=1 // pred_region
      _
    $region13: #{tpu_custom_call.1} parent=1 // pred_fallthru
      _
    // Predicated region
    $region14: #{tpu_custom_call.1} parent=1 // pred_check
      _
    $region15: #{tpu_custom_call.1} parent=1 // pred_check_branch
      %41 = sbr.rel (0) target = $region17
    $region16: #{tpu_custom_call.1} parent=1 // pred_region
      %s43 = ssub.s32 2048, 2048
      %44 = vsyncadd [#allocation6], %s43
      %s45 = sshll.u32 [#allocation7], 4
      %s46 = int_to_ptr.vmem [resolvable:$true] %s45
      %51 = dma.hbm_to_vmem [thread:$0]  %s3, 2048, %s46, [#allocation6], 128, 128, 8
    $region17: #{tpu_custom_call.1} parent=1 // pred_fallthru
      _
    // Predicated region
    $region18: #{tpu_custom_call.1} parent=1 // pred_check
      _
    $region19: #{tpu_custom_call.1} parent=1 // pred_check_branch
      %53 = sbr.rel (0) target = $region21
    $region20: #{tpu_custom_call.1} parent=1 // pred_region
      _
    $region21: #{tpu_custom_call.1} parent=1 // pred_fallthru
      _
    // Predicated region
    $region22: #{tpu_custom_call.1} parent=1 // pred_check
      _
    $region23: #{tpu_custom_call.1} parent=1 // pred_check_branch
      %55 = sbr.rel (0) target = $region25
    $region24: #{tpu_custom_call.1} parent=1 // pred_region
      %s57 = ssub.s32 2048, 2048
      %58 = vsyncadd [#allocation9], %s57
      %s59 = sshll.u32 [#allocation8], 4
      %s60 = int_to_ptr.vmem [resolvable:$true] %s59
      %65 = dma.hbm_to_vmem [thread:$0]  %s5, 2048, %s60, [#allocation9], 64, 64, 4
    $region25: #{tpu_custom_call.1} parent=1 // pred_fallthru
      _
    // Predicated region
    $region26: #{tpu_custom_call.1} parent=1 // pred_check
      _
    $region27: #{tpu_custom_call.1} parent=1 // pred_check_branch
      %67 = sbr.rel (0) target = $region29
    $region28: #{tpu_custom_call.1} parent=1 // pred_region
      _
    $region29: #{tpu_custom_call.1} parent=1 // pred_fallthru
      _
    // Predicated region
    $region30: #{tpu_custom_call.1} parent=1 // pred_check
      _
    $region31: #{tpu_custom_call.1} parent=1 // pred_check_branch
      %69 = sbr.rel (0) target = $region33
    $region32: #{tpu_custom_call.1} parent=1 // pred_region
      %70 = dma.done [#allocation3], 128
    $region33: #{tpu_custom_call.1} parent=1 // pred_fallthru
      _
    // Predicated region
    $region34: #{tpu_custom_call.1} parent=1 // pred_check
      _
    $region35: #{tpu_custom_call.1} parent=1 // pred_check_branch
      %72 = sbr.rel (0) target = $region37
    $region36: #{tpu_custom_call.1} parent=1 // pred_region
      %73 = dma.done [#allocation6], 512
    $region37: #{tpu_custom_call.1} parent=1 // pred_fallthru
      _
    // Predicated region
    $region38: #{tpu_custom_call.1} parent=1 // pred_check
      _
    $region39: #{tpu_custom_call.1} parent=1 // pred_check_branch
      %75 = sbr.rel (0) target = $region41
    $region40: #{tpu_custom_call.1} parent=1 // pred_region
      %76 = dma.done [#allocation6], 2048
    $region41: #{tpu_custom_call.1} parent=1 // pred_fallthru
      _
    // Predicated region
    $region42: #{tpu_custom_call.1} parent=1 // pred_check
      _
    $region43: #{tpu_custom_call.1} parent=1 // pred_check_branch
      %78 = sbr.rel (0) target = $region45
    $region44: #{tpu_custom_call.1} parent=1 // pred_region
      %79 = dma.done [#allocation9], 2048
    $region45: #{tpu_custom_call.1} parent=1 // pred_fallthru
      _
    %v81 = vld [vmem:[#allocation2] sm:$0xff]
    %v82 = vpack.c.bf16 %v81, %v81
    %v83 = vld [vmem:[#allocation5] sm:$0xf]
    %v84 = vld [vmem:[#allocation5 + $0x4] sm:$0xf]
    %v85 = vld [vmem:[#allocation5 + $0x8] sm:$0xf]
    %v86 = vld [vmem:[#allocation5 + $0xc] sm:$0xf]
    %v87 = vld [vmem:[#allocation5 + $0x10] sm:$0xf]
    %v88 = vld [vmem:[#allocation5 + $0x14] sm:$0xf]
    %v89 = vld [vmem:[#allocation5 + $0x18] sm:$0xf]
    %v90 = vld [vmem:[#allocation5 + $0x1c] sm:$0xf]
    %v91 = vld [vmem:[%s2] sm:$0x1]
    %v93 = vlaneseq
    %v94 = vshrl.u32 %v93, 7
    %v95 = vsub.s32 0, %v94
    %v96 = vrot.slane %v91, %v95
    %v106 = vunpack.c.l.b16 %v83
    %v107 = vunpack.c.l.b16 %v84
    %v108 = vunpack.c.l.b16 %v85
    %v109 = vunpack.c.l.b16 %v86
    %v110 = vunpack.c.l.b16 %v87
    %v111 = vunpack.c.l.b16 %v88
    %v112 = vunpack.c.l.b16 %v89
    %v113 = vunpack.c.l.b16 %v90
    %v114 = vpack.c.b16 %v107, %v106
    %v115 = vpack.c.b16 %v109, %v108
    %v116 = vpack.c.b16 %v111, %v110
    %v117 = vpack.c.b16 %v113, %v112
    %vm122 = vcmask 523264
    %v124 = vsel %vm122, %v82, 0
    %126 = vmatprep.subr.bf16.mxu0 0
    %127 = vmatpush1.bf16.msra.mxu0 %v114
    %128 = vmatprep.subr.bf16.mxu0 0
    %129 = vmatpush1.bf16.msra.mxu0 %v115
    %130 = vmatprep.subr.bf16.mxu0 0
    %131 = vmatpush1.bf16.msra.mxu0 %v116
    %132 = vmatprep.subr.bf16.mxu0 0
    %133 = vmatpush1.bf16.msra.mxu0 %v117
    %134 = vmatprep.subr.bf16.mxu0 0
    %135 = vmatpush1.bf16.msra.mxu0 0
    %136 = vmatprep.subr.bf16.mxu0 0
    %137 = vmatpush1.bf16.msra.mxu0 0
    %138 = vmatprep.subr.bf16.mxu0 0
    %139 = vmatpush1.bf16.msra.mxu0 0
    %140 = vmatprep.subr.bf16.mxu0 0
    %141 = vmatpush1.bf16.msra.mxu0 0
    %142 = vmatprep.subr.bf16.mxu0 0
    %143 = vmatpush1.bf16.msra.mxu0 0
    %144 = vmatprep.subr.bf16.mxu0 0
    %145 = vmatpush1.bf16.msra.mxu0 0
    %146 = vmatprep.subr.bf16.mxu0 0
    %147 = vmatpush1.bf16.msra.mxu0 0
    %148 = vmatprep.subr.bf16.mxu0 0
    %149 = vmatpush1.bf16.msra.mxu0 0
    %150 = vmatprep.subr.bf16.mxu0 0
    %151 = vmatpush1.bf16.msra.mxu0 0
    %152 = vmatprep.subr.bf16.mxu0 0
    %153 = vmatpush1.bf16.msra.mxu0 0
    %154 = vmatprep.subr.bf16.mxu0 0
    %155 = vmatpush1.bf16.msra.mxu0 0
    %156 = vmatprep.subr.bf16.mxu0 0
    %157 = vmatpush1.bf16.msra.mxu0 0
    %158 = vmatprep.mubr.bf16.mxu0 0
    %159 = vmatmul.mubr.bf16.gmra.mrb[0].mxu0 %v124
    %v160 = vpop.f32.mrb[0].mxu0
    %v161 = vadd.f32 %v96, %v160
    %v162 = vpop.f32.mrb[0].mxu0
    %v163 = vpop.f32.mrb[0].mxu0
    %v164 = vpop.f32.mrb[0].mxu0
    %165 = vdwg.mxu0
    %v166 = vsub.f32 0.0, %v161
    %v167 = vmul.f32 %v166, 1.442695
    %v168 = vpow.pop %v167
    %v169 = vadd.f32 %v168, 1.0
    %v170 = vrcp.pop %v169
    %v171 = vpack.c.bf16 %v170, %v170
    %v172 = vld [vmem:[#allocation7] sm:$0xff]
    %v173 = vld [vmem:[#allocation7 + $0x8] sm:$0xff]
    %v174 = vld [vmem:[#allocation7 + $0x10] sm:$0xff]
    %v175 = vld [vmem:[#allocation7 + $0x18] sm:$0xff]
    %v176 = vld [vmem:[#allocation7 + $0x20] sm:$0xff]
    %v177 = vld [vmem:[#allocation7 + $0x28] sm:$0xff]
    %v178 = vld [vmem:[#allocation7 + $0x30] sm:$0xff]
    %v179 = vld [vmem:[#allocation7 + $0x38] sm:$0xff]
    %v180 = vld [vmem:[#allocation7 + $0x40] sm:$0xff]
    %v181 = vld [vmem:[#allocation7 + $0x48] sm:$0xff]
    %v182 = vld [vmem:[#allocation7 + $0x50] sm:$0xff]
    %v183 = vld [vmem:[#allocation7 + $0x58] sm:$0xff]
    %v184 = vld [vmem:[#allocation7 + $0x60] sm:$0xff]
    %v185 = vld [vmem:[#allocation7 + $0x68] sm:$0xff]
    %v186 = vld [vmem:[#allocation7 + $0x70] sm:$0xff]
    %v187 = vld [vmem:[#allocation7 + $0x78] sm:$0xff]
    %v188 = vld [vmem:[%s4] sm:$0x3]
    %v190 = vlaneseq
    %v191 = vshrl.u32 %v190, 7
    %v192 = vsub.s32 0, %v191
    %v193 = vrot.slane %v188, %v192
    %v194 = vlaneseq
    %v195 = vshrl.u32 %v194, 7
    %v196 = vsub.s32 1, %v195
    %v197 = vrot.slane %v188, %v196
    %v216 = vunpack.c.l.b16 %v172
    %v217 = vunpack.c.h.b16 %v172
    %v218 = vunpack.c.l.b16 %v173
    %v219 = vunpack.c.h.b16 %v173
    %v220 = vunpack.c.l.b16 %v174
    %v221 = vunpack.c.h.b16 %v174
    %v222 = vunpack.c.l.b16 %v175
    %v223 = vunpack.c.h.b16 %v175
    %v224 = vunpack.c.l.b16 %v176
    %v225 = vunpack.c.h.b16 %v176
    %v226 = vunpack.c.l.b16 %v177
    %v227 = vunpack.c.h.b16 %v177
    %v228 = vunpack.c.l.b16 %v178
    %v229 = vunpack.c.h.b16 %v178
    %v230 = vunpack.c.l.b16 %v179
    %v231 = vunpack.c.h.b16 %v179
    %v232 = vunpack.c.l.b16 %v180
    %v233 = vunpack.c.h.b16 %v180
    %v234 = vunpack.c.l.b16 %v181
    %v235 = vunpack.c.h.b16 %v181
    %v236 = vunpack.c.l.b16 %v182
    %v237 = vunpack.c.h.b16 %v182
    %v238 = vunpack.c.l.b16 %v183
    %v239 = vunpack.c.h.b16 %v183
    %v240 = vunpack.c.l.b16 %v184
    %v241 = vunpack.c.h.b16 %v184
    %v242 = vunpack.c.l.b16 %v185
    %v243 = vunpack.c.h.b16 %v185
    %v244 = vunpack.c.l.b16 %v186
    %v245 = vunpack.c.h.b16 %v186
    %v246 = vunpack.c.l.b16 %v187
    %v247 = vunpack.c.h.b16 %v187
    %v248 = vpack.c.b16 %v218, %v216
    %v249 = vpack.c.b16 %v219, %v217
    %v250 = vpack.c.b16 %v222, %v220
    %v251 = vpack.c.b16 %v223, %v221
    %v252 = vpack.c.b16 %v226, %v224
    %v253 = vpack.c.b16 %v227, %v225
    %v254 = vpack.c.b16 %v230, %v228
    %v255 = vpack.c.b16 %v231, %v229
    %v256 = vpack.c.b16 %v234, %v232
    %v257 = vpack.c.b16 %v235, %v233
    %v258 = vpack.c.b16 %v238, %v236
    %v259 = vpack.c.b16 %v239, %v237
    %v260 = vpack.c.b16 %v242, %v240
    %v261 = vpack.c.b16 %v243, %v241
    %v262 = vpack.c.b16 %v246, %v244
    %v263 = vpack.c.b16 %v247, %v245
    %280 = vmatprep.subr.bf16.mxu0 %v249
    %281 = vmatpush1.bf16.msra.mxu0 %v248
    %282 = vmatprep.subr.bf16.mxu0 %v251
    %283 = vmatpush1.bf16.msra.mxu0 %v250
    %284 = vmatprep.subr.bf16.mxu0 %v253
    %285 = vmatpush1.bf16.msra.mxu0 %v252
    %286 = vmatprep.subr.bf16.mxu0 %v255
    %287 = vmatpush1.bf16.msra.mxu0 %v254
    %288 = vmatprep.subr.bf16.mxu0 %v257
    %289 = vmatpush1.bf16.msra.mxu0 %v256
    %290 = vmatprep.subr.bf16.mxu0 %v259
    %291 = vmatpush1.bf16.msra.mxu0 %v258
    %292 = vmatprep.subr.bf16.mxu0 %v261
    %293 = vmatpush1.bf16.msra.mxu0 %v260
    %294 = vmatprep.subr.bf16.mxu0 %v263
    %295 = vmatpush1.bf16.msra.mxu0 %v262
    %296 = vmatprep.subr.bf16.mxu0 0
    %297 = vmatpush1.bf16.msra.mxu0 0
    %298 = vmatprep.subr.bf16.mxu0 0
    %299 = vmatpush1.bf16.msra.mxu0 0
    %300 = vmatprep.subr.bf16.mxu0 0
    %301 = vmatpush1.bf16.msra.mxu0 0
    %302 = vmatprep.subr.bf16.mxu0 0
    %303 = vmatpush1.bf16.msra.mxu0 0
    %304 = vmatprep.subr.bf16.mxu0 0
    %305 = vmatpush1.bf16.msra.mxu0 0
    %306 = vmatprep.subr.bf16.mxu0 0
    %307 = vmatpush1.bf16.msra.mxu0 0
    %308 = vmatprep.subr.bf16.mxu0 0
    %309 = vmatpush1.bf16.msra.mxu0 0
    %310 = vmatprep.subr.bf16.mxu0 0
    %311 = vmatpush1.bf16.msra.mxu0 0
    %312 = vmatprep.mubr.bf16.mxu0 0
    %313 = vmatmul.mubr.bf16.gmra.mrb[0].mxu0 %v171
    %v314 = vpop.f32.mrb[0].mxu0
    %v315 = vadd.f32 %v193, %v314
    %v316 = vpop.f32.mrb[0].mxu0
    %v317 = vadd.f32 %v197, %v316
    %v318 = vpop.f32.mrb[0].mxu0
    %v319 = vpop.f32.mrb[0].mxu0
    %320 = vdwg.mxu0
    %v321 = vsub.f32 0.0, %v315
    %v322 = vsub.f32 0.0, %v317
    %v323 = vmul.f32 %v321, 1.442695
    %v324 = vpow.pop %v323
    %v325 = vmul.f32 %v322, 1.442695
    %v326 = vpow.pop %v325
    %v327 = vadd.f32 %v324, 1.0
    %v328 = vadd.f32 %v326, 1.0
    %v329 = vrcp.pop %v327
    %v330 = vrcp.pop %v328
    %v331 = vpack.c.bf16 %v329, %v329
    %v332 = vpack.c.bf16 %v330, %v330
    %v333 = vld [vmem:[#allocation8] sm:$0xf]
    %v334 = vld [vmem:[#allocation8 + $0x4] sm:$0xf]
    %v335 = vld [vmem:[#allocation8 + $0x8] sm:$0xf]
    %v336 = vld [vmem:[#allocation8 + $0xc] sm:$0xf]
    %v337 = vld [vmem:[#allocation8 + $0x10] sm:$0xf]
    %v338 = vld [vmem:[#allocation8 + $0x14] sm:$0xf]
    %v339 = vld [vmem:[#allocation8 + $0x18] sm:$0xf]
    %v340 = vld [vmem:[#allocation8 + $0x1c] sm:$0xf]
    %v341 = vld [vmem:[#allocation8 + $0x20] sm:$0xf]
    %v342 = vld [vmem:[#allocation8 + $0x24] sm:$0xf]
    %v343 = vld [vmem:[#allocation8 + $0x28] sm:$0xf]
    %v344 = vld [vmem:[#allocation8 + $0x2c] sm:$0xf]
    %v345 = vld [vmem:[#allocation8 + $0x30] sm:$0xf]
    %v346 = vld [vmem:[#allocation8 + $0x34] sm:$0xf]
    %v347 = vld [vmem:[#allocation8 + $0x38] sm:$0xf]
    %v348 = vld [vmem:[#allocation8 + $0x3c] sm:$0xf]
    %v349 = vld [vmem:[#allocation8 + $0x40] sm:$0xf]
    %v350 = vld [vmem:[#allocation8 + $0x44] sm:$0xf]
    %v351 = vld [vmem:[#allocation8 + $0x48] sm:$0xf]
    %v352 = vld [vmem:[#allocation8 + $0x4c] sm:$0xf]
    %v353 = vld [vmem:[#allocation8 + $0x50] sm:$0xf]
    %v354 = vld [vmem:[#allocation8 + $0x54] sm:$0xf]
    %v355 = vld [vmem:[#allocation8 + $0x58] sm:$0xf]
    %v356 = vld [vmem:[#allocation8 + $0x5c] sm:$0xf]
    %v357 = vld [vmem:[#allocation8 + $0x60] sm:$0xf]
    %v358 = vld [vmem:[#allocation8 + $0x64] sm:$0xf]
    %v359 = vld [vmem:[#allocation8 + $0x68] sm:$0xf]
    %v360 = vld [vmem:[#allocation8 + $0x6c] sm:$0xf]
    %v361 = vld [vmem:[#allocation8 + $0x70] sm:$0xf]
    %v362 = vld [vmem:[#allocation8 + $0x74] sm:$0xf]
    %v363 = vld [vmem:[#allocation8 + $0x78] sm:$0xf]
    %v364 = vld [vmem:[#allocation8 + $0x7c] sm:$0xf]
    %v365 = vld [vmem:[%s6] sm:$0x1]
    %v367 = vlaneseq
    %v368 = vshrl.u32 %v367, 7
    %v369 = vsub.s32 0, %v368
    %v370 = vrot.slane %v365, %v369
    %v404 = vunpack.c.l.b16 %v333
    %v405 = vunpack.c.l.b16 %v334
    %v406 = vunpack.c.l.b16 %v335
    %v407 = vunpack.c.l.b16 %v336
    %v408 = vunpack.c.l.b16 %v337
    %v409 = vunpack.c.l.b16 %v338
    %v410 = vunpack.c.l.b16 %v339
    %v411 = vunpack.c.l.b16 %v340
    %v412 = vunpack.c.l.b16 %v341
    %v413 = vunpack.c.l.b16 %v342
    %v414 = vunpack.c.l.b16 %v343
    %v415 = vunpack.c.l.b16 %v344
    %v416 = vunpack.c.l.b16 %v345
    %v417 = vunpack.c.l.b16 %v346
    %v418 = vunpack.c.l.b16 %v347
    %v419 = vunpack.c.l.b16 %v348
    %v420 = vunpack.c.l.b16 %v349
    %v421 = vunpack.c.l.b16 %v350
    %v422 = vunpack.c.l.b16 %v351
    %v423 = vunpack.c.l.b16 %v352
    %v424 = vunpack.c.l.b16 %v353
    %v425 = vunpack.c.l.b16 %v354
    %v426 = vunpack.c.l.b16 %v355
    %v427 = vunpack.c.l.b16 %v356
    %v428 = vunpack.c.l.b16 %v357
    %v429 = vunpack.c.l.b16 %v358
    %v430 = vunpack.c.l.b16 %v359
    %v431 = vunpack.c.l.b16 %v360
    %v432 = vunpack.c.l.b16 %v361
    %v433 = vunpack.c.l.b16 %v362
    %v434 = vunpack.c.l.b16 %v363
    %v435 = vunpack.c.l.b16 %v364
    %v436 = vpack.c.b16 %v405, %v404
    %v437 = vpack.c.b16 %v407, %v406
    %v438 = vpack.c.b16 %v409, %v408
    %v439 = vpack.c.b16 %v411, %v410
    %v440 = vpack.c.b16 %v413, %v412
    %v441 = vpack.c.b16 %v415, %v414
    %v442 = vpack.c.b16 %v417, %v416
    %v443 = vpack.c.b16 %v419, %v418
    %v444 = vpack.c.b16 %v421, %v420
    %v445 = vpack.c.b16 %v423, %v422
    %v446 = vpack.c.b16 %v425, %v424
    %v447 = vpack.c.b16 %v427, %v426
    %v448 = vpack.c.b16 %v429, %v428
    %v449 = vpack.c.b16 %v431, %v430
    %v450 = vpack.c.b16 %v433, %v432
    %v451 = vpack.c.b16 %v435, %v434
    %468 = vmatprep.subr.bf16.mxu0 0
    %469 = vmatpush1.bf16.msra.mxu0 %v436
    %470 = vmatprep.subr.bf16.mxu0 0
    %471 = vmatpush1.bf16.msra.mxu0 %v437
    %472 = vmatprep.subr.bf16.mxu0 0
    %473 = vmatpush1.bf16.msra.mxu0 %v438
    %474 = vmatprep.subr.bf16.mxu0 0
    %475 = vmatpush1.bf16.msra.mxu0 %v439
    %476 = vmatprep.subr.bf16.mxu0 0
    %477 = vmatpush1.bf16.msra.mxu0 %v440
    %478 = vmatprep.subr.bf16.mxu0 0
    %479 = vmatpush1.bf16.msra.mxu0 %v441
    %480 = vmatprep.subr.bf16.mxu0 0
    %481 = vmatpush1.bf16.msra.mxu0 %v442
    %482 = vmatprep.subr.bf16.mxu0 0
    %483 = vmatpush1.bf16.msra.mxu0 %v443
    %484 = vmatprep.subr.bf16.mxu0 0
    %485 = vmatpush1.bf16.msra.mxu0 %v444
    %486 = vmatprep.subr.bf16.mxu0 0
    %487 = vmatpush1.bf16.msra.mxu0 %v445
    %488 = vmatprep.subr.bf16.mxu0 0
    %489 = vmatpush1.bf16.msra.mxu0 %v446
    %490 = vmatprep.subr.bf16.mxu0 0
    %491 = vmatpush1.bf16.msra.mxu0 %v447
    %492 = vmatprep.subr.bf16.mxu0 0
    %493 = vmatpush1.bf16.msra.mxu0 %v448
    %494 = vmatprep.subr.bf16.mxu0 0
    %495 = vmatpush1.bf16.msra.mxu0 %v449
    %496 = vmatprep.subr.bf16.mxu0 0
    %497 = vmatpush1.bf16.msra.mxu0 %v450
    %498 = vmatprep.subr.bf16.mxu0 0
    %499 = vmatpush1.bf16.msra.mxu0 %v451
    %500 = vmatprep.mubr.bf16.mxu0 %v332
    %501 = vmatmul.mubr.bf16.gmra.mrb[0].mxu0 %v331
    %v502 = vpop.f32.mrb[0].mxu0
    %v503 = vadd.f32 %v370, %v502
    %v504 = vpop.f32.mrb[0].mxu0
    %v505 = vpop.f32.mrb[0].mxu0
    %v506 = vpop.f32.mrb[0].mxu0
    %507 = vdwg.mxu0
    %508 = vst [vmem:[#allocation10] sm:$0xff] %v503
    // Predicated region
    $region46: #{tpu_custom_call.1} parent=1 // pred_check
      _
    $region47: #{tpu_custom_call.1} parent=1 // pred_check_branch
      %510 = sbr.rel (0) target = $region49
    $region48: #{tpu_custom_call.1} parent=1 // pred_region
      %s512 = ssub.s32 128, 128
      %513 = vsyncadd [#allocation4], %s512
      %s515 = sshll.u32 [#allocation10], 4
      %s516 = int_to_ptr.vmem [resolvable:$true] %s515
      %518 = dma.vmem_to_hbm [thread:$0]  %s516, 128, %s7, [#allocation4]
    $region49: #{tpu_custom_call.1} parent=1 // pred_fallthru
      _
    // Predicated region
    $region50: #{tpu_custom_call.1} parent=1 // pred_check
      _
    $region51: #{tpu_custom_call.1} parent=1 // pred_check_branch
      %520 = sbr.rel (0) target = $region53
    $region52: #{tpu_custom_call.1} parent=1 // pred_region
      %521 = dma.done [#allocation4], 128
    $region53: #{tpu_custom_call.1} parent=1 // pred_fallthru
      _
    %522 = vsyncpa [#allocation3], 1
    %523 = vsyncpa [#allocation6], 1
    %524 = vsyncpa [#allocation9], 1
    %525 = vsyncpa [#allocation4], 1

</llo_original>
